<compile_context>
chip_gen: v5e
topology: v5e:2x2
jax: 0.10.0
libtpu: 0.0.40
codegen_flags: <defaults>
</compile_context>

<pallas_src>
import functools
import math

import jax
import jax.numpy as jnp
from jax import lax
from jax.experimental import pallas as pl
from jax.experimental.pallas import tpu as pltpu


def _round_up(v: int, m: int) -> int:
    return (v + m - 1) // m * m


def _hypergrid_kernel(ctx_sref, x_ref, wcp_ref, bias_ref, w_ref, out_ref,
                      wg_ref, *, context_dim):
    # ctx_sref : SMEM (B, CD)            full context table, scalar reads
    # x_ref    : VMEM (1, TN, DIM)
    # wcp_ref  : VMEM (CD, DIM, TO)      contextual-projection slab for this o-tile
    # bias_ref : VMEM (DIM, TO)
    # w_ref    : VMEM (DIM, TO)
    # out_ref  : VMEM (1, TN, TO)
    # wg_ref   : VMEM scratch (DIM, TO)  gated weight, persists across N-tiles
    b = pl.program_id(1)
    n = pl.program_id(2)

    # The gated weight depends only on (batch, o-tile): compute it once at the
    # first N-tile and keep it resident in VMEM for the remaining N-tiles.
    @pl.when(n == 0)
    def _():
        def body(c, acc):
            return acc + ctx_sref[b, c] * wcp_ref[c].astype(jnp.float32)

        logits = lax.fori_loop(0, context_dim, body,
                               bias_ref[...].astype(jnp.float32))
        gate = jax.nn.sigmoid(logits)
        wg_ref[...] = (w_ref[...].astype(jnp.float32) * gate).astype(wg_ref.dtype)

    # Main matmul on the MXU: operands in x.dtype (bf16 fast path when the
    # model is bf16), f32 accumulation.
    out_ref[0] = jnp.dot(
        x_ref[0], wg_ref[...], preferred_element_type=jnp.float32
    ).astype(out_ref.dtype)


def hypergrid_linear(x, context, weights, wcp, bias, *, n_tile: int = 256):
    """x: (B, N, dim); context: (B, cd); weights: (dim, dim_out);
    wcp: (cd, dim*dim_out) (= transpose of torch Linear.weight); bias: (dim*dim_out,)."""
    B, N, dim = x.shape
    dim_w, dim_out = weights.shape
    assert dim_w == dim
    assert dim == dim_out, "module's sqrt-rearrange implies dim == dim_out"
    cd = context.shape[-1]
    assert context.shape == (B, cd)
    assert wcp.shape == (cd, dim * dim_out)
    assert bias.shape == (dim * dim_out,)

    # ---- wrapper-side layout glue (plain JAX, one-time) ---------------------
    # Lane-dense output: pad dim_out to a multiple of 128, optionally tile it.
    to_full = _round_up(dim_out, 128)
    if to_full <= 512:
        t_o = to_full
    elif to_full % 512 == 0:
        t_o = 512
    elif to_full % 256 == 0:
        t_o = 256
    else:
        t_o = 128
    o_tiles = to_full // t_o

    # N tiling (sublane-aligned).
    n_tile = max(8, _round_up(min(n_tile, 1024), 8))
    if N <= n_tile:
        t_n = _round_up(N, 8)
        n_pad = t_n
    else:
        t_n = n_tile
        n_pad = _round_up(N, t_n)
    n_tiles = n_pad // t_n

    wcp3 = wcp.reshape(cd, dim, dim_out)     # 'b (i o)' split done outside the kernel
    bias2 = bias.reshape(dim, dim_out)
    w_p = weights
    if to_full != dim_out:
        pad = to_full - dim_out
        w_p = jnp.pad(weights, ((0, 0), (0, pad)))            # zero cols => zero output cols
        wcp3 = jnp.pad(wcp3, ((0, 0), (0, 0), (0, pad)))
        bias2 = jnp.pad(bias2, ((0, 0), (0, pad)))
    x_p = x if n_pad == N else jnp.pad(x, ((0, 0), (0, n_pad - N), (0, 0)))
    ctx = context.astype(jnp.float32)

    # ---- VMEM budget: only raise the scoped limit when blocks need it -------
    def _isz(a):
        return jnp.dtype(a.dtype).itemsize

    est = (2 * t_n * dim * _isz(x_p)                 # x tiles (double buffered)
           + 2 * t_n * t_o * _isz(x_p)               # out tiles
           + 2 * cd * dim * t_o * _isz(wcp3)         # wcp slab
           + 2 * dim * t_o * (_isz(bias2) + _isz(w_p))
           + dim * t_o * _isz(x_p))                  # gated-weight scratch
    vmem_limit = None
    if est > 16 * 1024 * 1024:
        vmem_limit = min(int(est * 1.25), 100 * 1024 * 1024)

    kernel = functools.partial(_hypergrid_kernel, context_dim=cd)
    out_p = pl.pallas_call(
        kernel,
        out_shape=jax.ShapeDtypeStruct((B, n_pad, to_full), x.dtype),
        grid=(o_tiles, B, n_tiles),
        in_specs=[
            pl.BlockSpec(memory_space=pltpu.MemorySpace.SMEM),        # context
            pl.BlockSpec((1, t_n, dim), lambda o, b, n: (b, n, 0)),   # x
            pl.BlockSpec((cd, dim, t_o), lambda o, b, n: (0, 0, o)),  # wcp3
            pl.BlockSpec((dim, t_o), lambda o, b, n: (0, o)),         # bias
            pl.BlockSpec((dim, t_o), lambda o, b, n: (0, o)),         # weights
        ],
        out_specs=pl.BlockSpec((1, t_n, t_o), lambda o, b, n: (b, n, o)),
        scratch_shapes=[pltpu.VMEM((dim, t_o), x.dtype)],
        compiler_params=pltpu.CompilerParams(
            dimension_semantics=("parallel", "parallel", "arbitrary"),
            vmem_limit_bytes=vmem_limit,
        ),
    )(ctx, x_p, wcp3, bias2, w_p)

    return out_p[:, :N, :dim_out]


def hypergrid_linear_ref(x, context, weights, wcp, bias):
    # Pure-JAX (f32) reference mirroring the PyTorch forward.
    gating = jax.nn.sigmoid(context.astype(jnp.float32) @ wcp + bias)
    dim, dim_out = weights.shape
    gating = gating.reshape(context.shape[0], dim, dim_out)
    w = weights[None] * gating
    return jnp.einsum("bnd,bde->bne", x.astype(jnp.float32), w)


if __name__ == "__main__":
    def make_inputs(seed, B, N, dim, dim_out, cd, x_dtype=jnp.float32):
        kx, kc, kw, kp, kb = jax.random.split(jax.random.PRNGKey(seed), 5)
        x = jax.random.normal(kx, (B, N, dim), dtype=jnp.float32).astype(x_dtype)
        context = jax.random.normal(kc, (B, cd), dtype=jnp.float32)
        weights = jax.random.normal(kw, (dim, dim_out), dtype=jnp.float32)   # torch.randn
        bound = 1.0 / math.sqrt(cd)                                          # nn.Linear init range
        wcp = jax.random.uniform(kp, (cd, dim * dim_out), jnp.float32, -bound, bound)
        bias = jax.random.uniform(kb, (dim * dim_out,), jnp.float32, -bound, bound)
        return x, context, weights, wcp, bias

    # Test 1: small f32 shapes matching the module spec (PRNGKey(0)).
    x, context, weights, wcp, bias = make_inputs(0, 2, 8, 16, 16, 8)
    out = jax.block_until_ready(hypergrid_linear(x, context, weights, wcp, bias))
    ref = hypergrid_linear_ref(x, context, weights, wcp, bias)
    assert out.shape == (2, 8, 16)
    assert jnp.allclose(out, ref, atol=1e-3, rtol=1e-4), "mismatch (f32, single tile)"

    # Test 2: exercises N padding/tiling (2 N-tiles) and gate reuse across tiles.
    x, context, weights, wcp, bias = make_inputs(1, 2, 300, 32, 32, 12)
    out = jax.block_until_ready(hypergrid_linear(x, context, weights, wcp, bias))
    ref = hypergrid_linear_ref(x, context, weights, wcp, bias)
    assert out.shape == (2, 300, 32)
    assert jnp.allclose(out, ref, atol=1e-3, rtol=1e-4), "mismatch (f32, tiled N)"

    # Test 3: bf16 activations exercise the bf16 MXU path (f32 accumulation).
    x, context, weights, wcp, bias = make_inputs(2, 2, 64, 16, 16, 8, jnp.bfloat16)
    out = jax.block_until_ready(hypergrid_linear(x, context, weights, wcp, bias))
    ref = hypergrid_linear_ref(x, context, weights, wcp, bias)
    assert out.dtype == jnp.bfloat16
    assert jnp.allclose(out.astype(jnp.float32), ref, atol=0.25, rtol=0.1), "mismatch (bf16)"

    print("KERNEL_OK")
</pallas_src>

<mosaic_0001>
module attributes {stable_mosaic.version = 11 : i64} {
  func.func @_hypergrid_kernel(%arg0: i32, %arg1: i32, %arg2: i32, %arg3: memref<2x8xf32, #tpu.memory_space<smem>>, %arg4: memref<1x8x16xf32, #tpu.memory_space<vmem>>, %arg5: memref<8x16x128xf32, #tpu.memory_space<vmem>>, %arg6: memref<16x128xf32, #tpu.memory_space<vmem>>, %arg7: memref<16x128xf32, #tpu.memory_space<vmem>>, %arg8: memref<1x8x128xf32, #tpu.memory_space<vmem>>, %arg9: memref<16x128xf32, #tpu.memory_space<vmem>>) attributes {dimension_semantics = [#tpu.dimension_semantics<parallel>, #tpu.dimension_semantics<parallel>, #tpu.dimension_semantics<arbitrary>], iteration_bounds = array<i64: 1, 2, 1>, scalar_prefetch = 0 : i64, scratch_operands = 1 : i64, tpu.core_type = #tpu.core_type<tc>, window_params = [{transform_indices = @transform_0, window_bounds = array<i64: 2, 8>}, {transform_indices = @transform_1, window_bounds = array<i64: 1, 8, 16>}, {transform_indices = @transform_2, window_bounds = array<i64: 8, 16, 128>}, {transform_indices = @transform_3, window_bounds = array<i64: 16, 128>}, {transform_indices = @transform_4, window_bounds = array<i64: 16, 128>}, {transform_indices = @transform_5, window_bounds = array<i64: 1, 8, 128>}]} {
    %c0_i32 = arith.constant 0 : i32
    %0 = arith.cmpi eq, %arg2, %c0_i32 : i32
    %1 = arith.extui %0 : i1 to i32
    %c0_i32_0 = arith.constant 0 : i32
    %2 = arith.cmpi ne, %1, %c0_i32_0 : i32
    scf.if %2 {
      %c0_8 = arith.constant 0 : index
      %c0_9 = arith.constant 0 : index
      %10 = vector.load %arg6[%c0_8, %c0_9] : memref<16x128xf32, #tpu.memory_space<vmem>>, vector<16x128xf32>
      %c0_i32_10 = arith.constant 0 : i32
      %c8_i32 = arith.constant 8 : i32
      %11 = arith.addi %c0_i32_10, %c8_i32 : i32
      %c1_i32 = arith.constant 1 : i32
      %12 = scf.for %arg10 = %c0_i32_10 to %11 step %c1_i32 iter_args(%arg11 = %10) -> (vector<16x128xf32>)  : i32 {
        %21 = arith.index_cast %arg1 : i32 to index
        %22 = arith.index_cast %arg10 : i32 to index
        %23 = memref.load %arg3[%21, %22] : memref<2x8xf32, #tpu.memory_space<smem>>
        %24 = arith.index_cast %arg10 : i32 to index
        %c0_17 = arith.constant 0 : index
        %c0_18 = arith.constant 0 : index
        %25 = vector.load %arg5[%24, %c0_17, %c0_18] : memref<8x16x128xf32, #tpu.memory_space<vmem>>, vector<1x16x128xf32>
        %26 = vector.shape_cast %25 : vector<1x16x128xf32> to vector<16x128xf32>
        %27 = vector.broadcast %23 : f32 to vector<16x128xf32>
        %28 = arith.mulf %27, %26 : vector<16x128xf32>
        %29 = arith.addf %arg11, %28 : vector<16x128xf32>
        scf.yield %29 : vector<16x128xf32>
      }
      %c8_i32_11 = arith.constant 8 : i32
      %13 = arith.negf %12 : vector<16x128xf32>
      %14 = math.exp %13 : vector<16x128xf32>
      %cst_12 = arith.constant 1.000000e+00 : f32
      %15 = vector.broadcast %cst_12 : f32 to vector<16x128xf32>
      %16 = arith.addf %15, %14 : vector<16x128xf32>
      %17 = arith.divf %15, %16 : vector<16x128xf32>
      %c0_13 = arith.constant 0 : index
      %c0_14 = arith.constant 0 : index
      %18 = vector.load %arg7[%c0_13, %c0_14] : memref<16x128xf32, #tpu.memory_space<vmem>>, vector<16x128xf32>
      %19 = arith.mulf %18, %17 : vector<16x128xf32>
      %c0_15 = arith.constant 0 : index
      %c0_16 = arith.constant 0 : index
      %20 = vector.load %arg9[%c0_15, %c0_16] : memref<16x128xf32, #tpu.memory_space<vmem>>, vector<16x128xf32>
      tpu.vector_store %arg9[%c0_15, %c0_16], %19 {strides = array<i32>} : memref<16x128xf32, #tpu.memory_space<vmem>>, vector<16x128xf32>,
    } else {
    }
    %c0 = arith.constant 0 : index
    %c0_1 = arith.constant 0 : index
    %c0_2 = arith.constant 0 : index
    %3 = vector.load %arg4[%c0, %c0_1, %c0_2] : memref<1x8x16xf32, #tpu.memory_space<vmem>>, vector<1x8x16xf32>
    %4 = vector.shape_cast %3 : vector<1x8x16xf32> to vector<8x16xf32>
    %c0_3 = arith.constant 0 : index
    %c0_4 = arith.constant 0 : index
    %5 = vector.load %arg9[%c0_3, %c0_4] : memref<16x128xf32, #tpu.memory_space<vmem>>, vector<16x128xf32>
    %cst = arith.constant dense<0.000000e+00> : vector<8x128xf32>
    %6 = tpu.matmul %4, %5, %cst {dimension_numbers = #tpu.dot_dimension_numbers<[1], [0], [0], [1], [0, 0, 1, 1], [], []>} : vector<8x16xf32>, vector<16x128xf32>, vector<8x128xf32> -> vector<8x128xf32>
    %c0_5 = arith.constant 0 : index
    %c0_6 = arith.constant 0 : index
    %c0_7 = arith.constant 0 : index
    %7 = vector.load %arg8[%c0_5, %c0_6, %c0_7] : memref<1x8x128xf32, #tpu.memory_space<vmem>>, vector<1x8x128xf32>
    %8 = vector.shape_cast %7 : vector<1x8x128xf32> to vector<8x128xf32>
    %9 = vector.shape_cast %6 : vector<8x128xf32> to vector<1x8x128xf32>
    tpu.vector_store %arg8[%c0_5, %c0_6, %c0_7], %9 {strides = array<i32>} : memref<1x8x128xf32, #tpu.memory_space<vmem>>, vector<1x8x128xf32>,
    return
  }
  func.func @transform_0(%arg0: i32, %arg1: i32, %arg2: i32) -> (i32, i32) {
    %c0_i32 = arith.constant 0 : i32
    %c0_i32_0 = arith.constant 0 : i32
    %c0_i32_1 = arith.constant 0 : i32
    return %c0_i32, %c0_i32_0 : i32, i32
  }
  func.func @transform_1(%arg0: i32, %arg1: i32, %arg2: i32) -> (i32, i32, i32) {
    %c0_i32 = arith.constant 0 : i32
    %c0_i32_0 = arith.constant 0 : i32
    return %arg1, %arg2, %c0_i32 : i32, i32, i32
  }
  func.func @transform_2(%arg0: i32, %arg1: i32, %arg2: i32) -> (i32, i32, i32) {
    %c0_i32 = arith.constant 0 : i32
    %c0_i32_0 = arith.constant 0 : i32
    %c0_i32_1 = arith.constant 0 : i32
    return %c0_i32, %c0_i32_0, %arg0 : i32, i32, i32
  }
  func.func @transform_3(%arg0: i32, %arg1: i32, %arg2: i32) -> (i32, i32) {
    %c0_i32 = arith.constant 0 : i32
    %c0_i32_0 = arith.constant 0 : i32
    return %c0_i32, %arg0 : i32, i32
  }
  func.func @transform_4(%arg0: i32, %arg1: i32, %arg2: i32) -> (i32, i32) {
    %c0_i32 = arith.constant 0 : i32
    %c0_i32_0 = arith.constant 0 : i32
    return %c0_i32, %arg0 : i32, i32
  }
  func.func @transform_5(%arg0: i32, %arg1: i32, %arg2: i32) -> (i32, i32, i32) {
    %c0_i32 = arith.constant 0 : i32
    return %arg1, %arg2, %arg0 : i32, i32, i32
  }
}

</mosaic_0001>

<llo_original>
// kernel: tpu_custom_call.1
$region0: #{tpu_custom_call.1}
  #allocation0 [shape = 'u32[]', space=smem, size = 0x4, offset = 0x4, fixed_abs, tag = 'smem constant byte address 0x4 - core index']
  #allocation1 [shape = 'u32[72,128]{1,0:T(1,128)}', space=vmem, size = 0x9000, scoped, tag = 'internal scratch']
  #allocation2 [shape = 'f32[16,128]{1,0:T(8,128)}', space=vmem, size = 0x2000, scoped, tag = 'scratch operand']
  %s0 = inlined_call_operand.hbm [shape: f32[2,8], index: 0, kind: input, shape index: {}]
  %s1 = inlined_call_operand.hbm [shape: f32[2,8,16], index: 1, kind: input, shape index: {}]
  %s2 = inlined_call_operand.hbm [shape: f32[8,16,128], index: 2, kind: input, shape index: {}]
  %s3 = inlined_call_operand.hbm [shape: f32[16,128], index: 3, kind: input, shape index: {}]
  %s4 = inlined_call_operand.hbm [shape: f32[16,128], index: 4, kind: input, shape index: {}]
  %s5 = inlined_call_operand.hbm [shape: f32[2,8,128], index: 5, kind: output, shape index: {}]
  %s6 = sld [smem:[#allocation0]]
  $region84: #{tpu_custom_call.1} parent=0
    _
  %s8 = ssub.s32 1, %s6
  %s9 = scalar_select 0, %s8, %s6
  $region1: #{tpu_custom_call.1} parent=0
    #allocation3 [shape = 'u8[1024]{0}', space=smem, size = 0x400, scoped, tag = 'input window, operand 0, single buffered']
    #allocation4 [shape = 's32[2]{0}', space=sflag, size = 0x8, scoped, tag = 'scoped memory for tpu_custom_call.1']
    #allocation5 [shape = 's32[2]{0}', space=sflag, size = 0x8, scoped, tag = 'scoped memory for tpu_custom_call.1']
    #allocation6 [shape = 's32[2]{0}', space=sflag, size = 0x8, scoped, tag = 'scoped memory for tpu_custom_call.1']
    #allocation7 [shape = 'u8[8192]{0}', space=vmem, size = 0x2000, scoped, tag = 'input window, operand 1']
    #allocation8 [shape = 'u8[65536]{0}', space=vmem, size = 0x10000, scoped, tag = 'input window, operand 2, single buffered']
    #allocation9 [shape = 's32[1]{0}', space=sflag, size = 0x4, scoped, tag = 'scoped memory for tpu_custom_call.1']
    #allocation10 [shape = 'u8[8192]{0}', space=vmem, size = 0x2000, scoped, tag = 'input window, operand 3, single buffered']
    #allocation11 [shape = 'u8[8192]{0}', space=vmem, size = 0x2000, scoped, tag = 'input window, operand 4, single buffered']
    #allocation12 [shape = 's32[1]{0}', space=sflag, size = 0x4, scoped, tag = 'scoped memory for tpu_custom_call.1']
    #allocation13 [shape = 'u8[8192]{0}', space=vmem, size = 0x2000, scoped, tag = 'output window, operand 0']
    %10 = vsyncpa [#allocation6], 0
    %11 = vsyncpa [#allocation4], 0
    %s12 = scalar_lea.sflag [#allocation4], 1
    %13 = vsyncpa %s12, 0
    %14 = vsyncpa [#allocation9], 0
    %15 = vsyncpa [#allocation12], 0
    %16 = vsyncpa [#allocation5], 0
    %s17 = scalar_lea.sflag [#allocation5], 1
    %18 = vsyncpa %s17, 0
    loop: start=0, step=1, limit=4
    $region2: #{tpu_custom_call.1} parent=1 // loop_pre_header
      _
    $region3: #{tpu_custom_call.1} parent=1 // loop_header
      %s20 = sphi 0, %s24
      %p21 = scmp.ge.s32.totalorder %s20, 4
      %s27 = sphi 0, %s46
      %s28 = sphi 0, %s42
      %s29 = sphi 0, %s38
      %s30 = sphi 0, %s27
      %s31 = sphi 0, %s28
      %s32 = sphi 0, %s29
      %s33 = sphi 0, %s30
      %s34 = sphi 0, %s31
      %s35 = sphi 0, %s32
      %s47 = sphi 0, %s47
      %s49 = sphi 0, %s47
      %s50 = sphi 0, %s49
      %s64 = sphi 0, %s50
      %s72 = sphi 0, %s74
      %s75 = sphi 0, %s72
      %s76 = sphi 0, %s75
      %s92 = sphi 0, %s76
      %s98 = sphi 0, %s100
      %s101 = sphi 0, %s98
      %s102 = sphi 0, %s101
      %s118 = sphi 0, %s102
      %s124 = sphi 0, %s126
      %s127 = sphi 0, %s124
      %s128 = sphi 0, %s127
      %s144 = sphi 0, %s128
      %s150 = sphi 0, %s152
      %s153 = sphi 0, %s150
      %s154 = sphi 0, %s153
      %s170 = sphi 0, %s154
      %s180 = sphi 0, %s182
      %s183 = sphi 0, %s180
      %s184 = sphi 0, %s183
      %s200 = sphi 0, %s184
    $region4: #{tpu_custom_call.1} parent=1 // loop_header_branch
      %23 = sbr.rel (%p21) target = $region8
    $region5: #{tpu_custom_call.1} parent=1 // loop_body
      %s25 = ssub.s32 %s20, 1
      %s26 = ssub.s32 %s20, 2
      %s36 = sadd.s32 1, %s29
      %p37 = scmp.ge.s32.totalorder %s36, 1
      %s38 = scalar_select %p37, 0, %s36
      %s39 = sadd.s32 1, %s28
      %s40 = scalar_select %p37, %s39, %s28
      %p41 = scmp.ge.s32.totalorder %s40, 2
      %s42 = scalar_select %p41, 0, %s40
      %s43 = sadd.s32 1, %s27
      %s44 = scalar_select %p41, %s43, %s27
      %p45 = scmp.ge.s32.totalorder %s44, 1
      %s46 = scalar_select %p45, 0, %s44
      %s48 = sadd.s32 %s47, 1
      %p51 = scmp.eq.s32.totalorder %s20, 1
      %p52 = scmp.ne.s32.totalorder %s47, %s49
      %p53 = scmp.eq.s32.totalorder %s20, 0
      %p54 = por %p52, %p53
      %p55 = scmp.ne.s32.totalorder %s47, %s49
      %p56 = scmp.eq.s32.totalorder %s25, 1
      %p57 = por %p55, %p56
      %p58 = scmp.ne.s32.totalorder %s49, %s50
      %p59 = scmp.eq.s32.totalorder %s25, 0
      %p60 = por %p58, %p59
      %p61 = scmp.ne.s32.totalorder %s49, %s50
      %p62 = scmp.eq.s32.totalorder %s26, 1
      %p63 = por %p61, %p62
      %p65 = scmp.ne.s32.totalorder %s50, %s64
      %p66 = scmp.eq.s32.totalorder %s26, 0
      %p67 = por %p65, %p66
      %s68 = ssub.s32 %s28, %s42
      %s69 = ssub.s32 %s29, %s38
      %s70 = sor.u32 %s68, %s69
      %p71 = scmp.eq.s32.totalorder %s70, 0
      %s73 = sadd.s32 %s72, 1
      %s74 = scalar_select %p71, %s72, %s73
      %p77 = pneg %p71
      %p78 = scmp.eq.s32.totalorder %s20, 1
      %p79 = por %p77, %p78
      %p80 = scmp.ne.s32.totalorder %s72, %s75
      %p81 = scmp.eq.s32.totalorder %s20, 0
      %p82 = por %p80, %p81
      %p83 = scmp.ne.s32.totalorder %s72, %s75
      %p84 = scmp.eq.s32.totalorder %s25, 1
      %p85 = por %p83, %p84
      %p86 = scmp.ne.s32.totalorder %s75, %s76
      %p87 = scmp.eq.s32.totalorder %s25, 0
      %p88 = por %p86, %p87
      %p89 = scmp.ne.s32.totalorder %s75, %s76
      %p90 = scmp.eq.s32.totalorder %s26, 1
      %p91 = por %p89, %p90
      %p93 = scmp.ne.s32.totalorder %s76, %s92
      %p94 = scmp.eq.s32.totalorder %s26, 0
      %p95 = por %p93, %p94
      %s96 = ssub.s32 %s27, %s46
      %p97 = scmp.eq.s32.totalorder %s96, 0
      %s99 = sadd.s32 %s98, 1
      %s100 = scalar_select %p97, %s98, %s99
      %p103 = pneg %p97
      %p104 = scmp.eq.s32.totalorder %s20, 1
      %p105 = por %p103, %p104
      %p106 = scmp.ne.s32.totalorder %s98, %s101
      %p107 = scmp.eq.s32.totalorder %s20, 0
      %p108 = por %p106, %p107
      %p109 = scmp.ne.s32.totalorder %s98, %s101
      %p110 = scmp.eq.s32.totalorder %s25, 1
      %p111 = por %p109, %p110
      %p112 = scmp.ne.s32.totalorder %s101, %s102
      %p113 = scmp.eq.s32.totalorder %s25, 0
      %p114 = por %p112, %p113
      %p115 = scmp.ne.s32.totalorder %s101, %s102
      %p116 = scmp.eq.s32.totalorder %s26, 1
      %p117 = por %p115, %p116
      %p119 = scmp.ne.s32.totalorder %s102, %s118
      %p120 = scmp.eq.s32.totalorder %s26, 0
      %p121 = por %p119, %p120
      %s122 = ssub.s32 %s27, %s46
      %p123 = scmp.eq.s32.totalorder %s122, 0
      %s125 = sadd.s32 %s124, 1
      %s126 = scalar_select %p123, %s124, %s125
      %p129 = pneg %p123
      %p130 = scmp.eq.s32.totalorder %s20, 1
      %p131 = por %p129, %p130
      %p132 = scmp.ne.s32.totalorder %s124, %s127
      %p133 = scmp.eq.s32.totalorder %s20, 0
      %p134 = por %p132, %p133
      %p135 = scmp.ne.s32.totalorder %s124, %s127
      %p136 = scmp.eq.s32.totalorder %s25, 1
      %p137 = por %p135, %p136
      %p138 = scmp.ne.s32.totalorder %s127, %s128
      %p139 = scmp.eq.s32.totalorder %s25, 0
      %p140 = por %p138, %p139
      %p141 = scmp.ne.s32.totalorder %s127, %s128
      %p142 = scmp.eq.s32.totalorder %s26, 1
      %p143 = por %p141, %p142
      %p145 = scmp.ne.s32.totalorder %s128, %s144
      %p146 = scmp.eq.s32.totalorder %s26, 0
      %p147 = por %p145, %p146
      %s148 = ssub.s32 %s27, %s46
      %p149 = scmp.eq.s32.totalorder %s148, 0
      %s151 = sadd.s32 %s150, 1
      %s152 = scalar_select %p149, %s150, %s151
      %p155 = pneg %p149
      %p156 = scmp.eq.s32.totalorder %s20, 1
      %p157 = por %p155, %p156
      %p158 = scmp.ne.s32.totalorder %s150, %s153
      %p159 = scmp.eq.s32.totalorder %s20, 0
      %p160 = por %p158, %p159
      %p161 = scmp.ne.s32.totalorder %s150, %s153
      %p162 = scmp.eq.s32.totalorder %s25, 1
      %p163 = por %p161, %p162
      %p164 = scmp.ne.s32.totalorder %s153, %s154
      %p165 = scmp.eq.s32.totalorder %s25, 0
      %p166 = por %p164, %p165
      %p167 = scmp.ne.s32.totalorder %s153, %s154
      %p168 = scmp.eq.s32.totalorder %s26, 1
      %p169 = por %p167, %p168
      %p171 = scmp.ne.s32.totalorder %s154, %s170
      %p172 = scmp.eq.s32.totalorder %s26, 0
      %p173 = por %p171, %p172
      %s174 = ssub.s32 %s28, %s42
      %s175 = ssub.s32 %s29, %s38
      %s176 = sor.u32 %s174, %s175
      %s177 = ssub.s32 %s27, %s46
      %s178 = sor.u32 %s176, %s177
      %p179 = scmp.eq.s32.totalorder %s178, 0
      %s181 = sadd.s32 %s180, 1
      %s182 = scalar_select %p179, %s180, %s181
      %p185 = pneg %p179
      %p186 = scmp.eq.s32.totalorder %s20, 1
      %p187 = por %p185, %p186
      %p188 = scmp.ne.s32.totalorder %s180, %s183
      %p189 = scmp.eq.s32.totalorder %s20, 0
      %p190 = por %p188, %p189
      %p191 = scmp.ne.s32.totalorder %s180, %s183
      %p192 = scmp.eq.s32.totalorder %s25, 1
      %p193 = por %p191, %p192
      %p194 = scmp.ne.s32.totalorder %s183, %s184
      %p195 = scmp.eq.s32.totalorder %s25, 0
      %p196 = por %p194, %p195
      %p197 = scmp.ne.s32.totalorder %s183, %s184
      %p198 = scmp.eq.s32.totalorder %s26, 1
      %p199 = por %p197, %p198
      %p201 = scmp.ne.s32.totalorder %s184, %s200
      %p202 = scmp.eq.s32.totalorder %s26, 0
      %p203 = por %p201, %p202
      %p204 = scmp.le.s32.totalorder 1, %s20
      %p205 = scmp.lt.s32.totalorder %s20, 3
      %p206 = pnand %p204, %p205
      %p207 = pneg %p206
      // Predicated region
      $region9: #{tpu_custom_call.1} parent=5 // pred_check
        _
      $region10: #{tpu_custom_call.1} parent=5 // pred_check_branch
        %209 = sbr.rel (%p206) target = $region12
      $region11: #{tpu_custom_call.1} parent=5 // pred_region
        %s210 = ssub.s32 %s20, 1
        // Predicated region
        $region13: #{tpu_custom_call.1} parent=11 // pred_check
          %p211 = pneg %p60
        $region14: #{tpu_custom_call.1} parent=11 // pred_check_branch
          %213 = sbr.rel (%p211) target = $region16
        $region15: #{tpu_custom_call.1} parent=11 // pred_region
          %215 = vsyncadd [#allocation6], 0
          %s217 = sshll.u32 %s0, 4
          %s218 = int_to_ptr.hbm [resolvable:$true] %s217
          %220 = dma.hbm_to_smem %s218, 32, [#allocation3], [#allocation6]
        $region16: #{tpu_custom_call.1} parent=11 // pred_fallthru
          _
        // Predicated region
        $region17: #{tpu_custom_call.1} parent=11 // pred_check
          %p221 = pneg %p114
        $region18: #{tpu_custom_call.1} parent=11 // pred_check_branch
          %223 = sbr.rel (%p221) target = $region20
        $region19: #{tpu_custom_call.1} parent=11 // pred_region
          %225 = vsyncadd [#allocation9], 0
          %s226 = smul.addr %s30, 8
          %s227 = scalar_lea.hbm %s2, %s226
          %s228 = sshll.u32 %s227, 4
          %s229 = int_to_ptr.hbm [resolvable:$true] %s228
          %s230 = sshll.u32 [#allocation8], 4
          %s231 = int_to_ptr.vmem [resolvable:$true] %s230
          %236 = dma.hbm_to_vmem [thread:$0]  %s229, 2048, %s231, [#allocation9], 128, 128, 8
        $region20: #{tpu_custom_call.1} parent=11 // pred_fallthru
          _
        // Predicated region
        $region21: #{tpu_custom_call.1} parent=11 // pred_check
          %p237 = pneg %p140
        $region22: #{tpu_custom_call.1} parent=11 // pred_check_branch
          %239 = sbr.rel (%p237) target = $region24
        $region23: #{tpu_custom_call.1} parent=11 // pred_region
          %241 = vsyncadd [#allocation9], 0
          %s242 = smul.addr %s30, 8
          %s243 = scalar_lea.hbm %s3, %s242
          %s244 = sshll.u32 %s243, 4
          %s245 = int_to_ptr.hbm [resolvable:$true] %s244
          %s246 = sshll.u32 [#allocation10], 4
          %s247 = int_to_ptr.vmem [resolvable:$true] %s246
          %252 = dma.hbm_to_vmem [thread:$0]  %s245, 256, %s247, [#allocation9], 128, 128, 8
        $region24: #{tpu_custom_call.1} parent=11 // pred_fallthru
          _
        // Predicated region
        $region25: #{tpu_custom_call.1} parent=11 // pred_check
          %p253 = pneg %p166
        $region26: #{tpu_custom_call.1} parent=11 // pred_check_branch
          %255 = sbr.rel (%p253) target = $region28
        $region27: #{tpu_custom_call.1} parent=11 // pred_region
          %257 = vsyncadd [#allocation12], 0
          %s258 = smul.addr %s30, 8
          %s259 = scalar_lea.hbm %s4, %s258
          %s260 = sshll.u32 %s259, 4
          %s261 = int_to_ptr.hbm [resolvable:$true] %s260
          %s262 = sshll.u32 [#allocation11], 4
          %s263 = int_to_ptr.vmem [resolvable:$true] %s262
          %268 = dma.hbm_to_vmem [thread:$0]  %s261, 256, %s263, [#allocation12], 128, 128, 8
        $region28: #{tpu_custom_call.1} parent=11 // pred_fallthru
          _
      $region12: #{tpu_custom_call.1} parent=5 // pred_fallthru
        _
      %p269 = scmp.lt.s32.totalorder %s20, 2
      // Predicated region
      $region29: #{tpu_custom_call.1} parent=5 // pred_check
        %p270 = pneg %p269
      $region30: #{tpu_custom_call.1} parent=5 // pred_check_branch
        %272 = sbr.rel (%p270) target = $region32
      $region31: #{tpu_custom_call.1} parent=5 // pred_region
        // Predicated region
        $region33: #{tpu_custom_call.1} parent=31 // pred_check
          %p273 = pneg %p82
        $region34: #{tpu_custom_call.1} parent=31 // pred_check_branch
          %275 = sbr.rel (%p273) target = $region36
        $region35: #{tpu_custom_call.1} parent=31 // pred_region
          %s276 = sand.u32 %s72, 1
          %s277 = scalar_lea.sflag [#allocation4], %s276
          %s278 = sand.u32 %s72, 1
          %s279 = smul.addr %s278, 8
          %s280 = scalar_lea.vmem [#allocation7], %s279
          %282 = vsyncadd %s277, 0
          %s283 = sadd.s32 %s29, %s28
          %s284 = smul.addr %s283, 8
          %s285 = scalar_lea.hbm %s1, %s284
          %s287 = sshll.u32 %s285, 4
          %s288 = int_to_ptr.hbm [resolvable:$true] %s287
          %s289 = sshll.u32 %s280, 4
          %s290 = int_to_ptr.vmem [resolvable:$true] %s289
          %292 = dma.hbm_to_vmem [thread:$0]  %s288, 128, %s290, %s277
        $region36: #{tpu_custom_call.1} parent=31 // pred_fallthru
          _
      $region32: #{tpu_custom_call.1} parent=5 // pred_fallthru
        _
      %p293 = scmp.le.s32.totalorder 1, %s20
      %p294 = scmp.lt.s32.totalorder %s20, 3
      %p295 = pnand %p293, %p294
      %p296 = pneg %p295
      // Predicated region
      $region37: #{tpu_custom_call.1} parent=5 // pred_check
        _
      $region38: #{tpu_custom_call.1} parent=5 // pred_check_branch
        %298 = sbr.rel (%p295) target = $region40
      $region39: #{tpu_custom_call.1} parent=5 // pred_region
        %s299 = ssub.s32 %s20, 1
        // Predicated region
        $region41: #{tpu_custom_call.1} parent=39 // pred_check
          %p300 = pneg %p60
        $region42: #{tpu_custom_call.1} parent=39 // pred_check_branch
          %302 = sbr.rel (%p300) target = $region44
        $region43: #{tpu_custom_call.1} parent=39 // pred_region
          %304 = dma.done [#allocation6], 32
        $region44: #{tpu_custom_call.1} parent=39 // pred_fallthru
          _
        %s305 = sand.u32 %s75, 1
        %s306 = scalar_lea.sflag [#allocation4], %s305
        %s307 = sand.u32 %s75, 1
        %s308 = smul.addr %s307, 8
        %s309 = scalar_lea.vmem [#allocation7], %s308
        // Predicated region
        $region45: #{tpu_custom_call.1} parent=39 // pred_check
          %p310 = pneg %p88
        $region46: #{tpu_custom_call.1} parent=39 // pred_check_branch
          %312 = sbr.rel (%p310) target = $region48
        $region47: #{tpu_custom_call.1} parent=39 // pred_region
          %314 = dma.done %s306, 128
        $region48: #{tpu_custom_call.1} parent=39 // pred_fallthru
          _
        // Predicated region
        $region49: #{tpu_custom_call.1} parent=39 // pred_check
          %p315 = pneg %p114
        $region50: #{tpu_custom_call.1} parent=39 // pred_check_branch
          %317 = sbr.rel (%p315) target = $region52
        $region51: #{tpu_custom_call.1} parent=39 // pred_region
          %319 = dma.done [#allocation9], 2048
        $region52: #{tpu_custom_call.1} parent=39 // pred_fallthru
          _
        // Predicated region
        $region53: #{tpu_custom_call.1} parent=39 // pred_check
          %p320 = pneg %p140
        $region54: #{tpu_custom_call.1} parent=39 // pred_check_branch
          %322 = sbr.rel (%p320) target = $region56
        $region55: #{tpu_custom_call.1} parent=39 // pred_region
          %324 = dma.done [#allocation9], 256
        $region56: #{tpu_custom_call.1} parent=39 // pred_fallthru
          _
        // Predicated region
        $region57: #{tpu_custom_call.1} parent=39 // pred_check
          %p325 = pneg %p166
        $region58: #{tpu_custom_call.1} parent=39 // pred_check_branch
          %327 = sbr.rel (%p325) target = $region60
        $region59: #{tpu_custom_call.1} parent=39 // pred_region
          %329 = dma.done [#allocation12], 256
        $region60: #{tpu_custom_call.1} parent=39 // pred_fallthru
          _
        %330 = sfence
        %p331 = pneg %p60
        %p332 = pneg %p57
        %s333 = sand.u32 %s75, 1
        %s334 = scalar_lea.sflag [#allocation4], %s333
        %s335 = sand.u32 %s75, 1
        %s336 = smul.addr %s335, 8
        %s337 = scalar_lea.vmem [#allocation7], %s336
        %p338 = pneg %p88
        %p339 = pneg %p85
        %p340 = pneg %p114
        %p341 = pneg %p111
        %p342 = pneg %p140
        %p343 = pneg %p137
        %p344 = pneg %p166
        %p345 = pneg %p163
        %p346 = pneg %p196
        %p347 = pneg %p193
        %s348 = sand.u32 %s183, 1
        %s349 = scalar_lea.sflag [#allocation5], %s348
        %s350 = sand.u32 %s183, 1
        %s351 = smul.addr %s350, 8
        %s352 = scalar_lea.vmem [#allocation13], %s351
        %p353 = scmp.eq.s32.totalorder %s32, 0
        // Predicated region
        $region61: #{tpu_custom_call.1} parent=39 // pred_check
          %p354 = pneg %p353
        $region62: #{tpu_custom_call.1} parent=39 // pred_check_branch
          %356 = sbr.rel (%p354) target = $region64
        $region63: #{tpu_custom_call.1} parent=39 // pred_region
          %v357 = vld [vmem:[#allocation10] sm:$0xff]
          %v358 = vld [vmem:[#allocation10 + $0x8] sm:$0xff]
          loop: start=0, step=1, limit=8
          $region65: #{tpu_custom_call.1} parent=63 // loop_pre_header
            _
          $region66: #{tpu_custom_call.1} parent=63 // loop_header
            %s360 = sphi 0, %s364
            %p361 = scmp.ge.s32.totalorder %s360, 8
            %v365 = vphi %v357, %v382
            %v366 = vphi %v358, %v383
          $region67: #{tpu_custom_call.1} parent=63 // loop_header_branch
            %363 = sbr.rel (%p361) target = $region71
          $region68: #{tpu_custom_call.1} parent=63 // loop_body
            %s367 = sshra.s32 %s360, 7
            %s368 = sand.u32 %s360, 127
            %s369 = sadd.s32 %s367, %s31
            %s370 = smul.u32 %s369, 128
            %s371 = sshra.s32 %s360, 7
            %s372 = sand.u32 %s360, 127
            %s373 = sadd.s32 %s370, %s372
            %s374 = sld [smem:[#allocation3 + %s373]]
            %s375 = smul.u32 %s360, 16
            %s376 = scalar_lea.vmem [#allocation8], %s375
            %v377 = vld [vmem:[%s376] sm:$0xff]
            %v378 = vld [vmem:[%s376 + $0x8] sm:$0xff]
            %v379 = vstv %s374
            %v380 = vmul.f32 %v379, %v377
            %v381 = vmul.f32 %v379, %v378
            %v382 = vadd.f32 %v365, %v380
            %v383 = vadd.f32 %v366, %v381
          $region69: #{tpu_custom_call.1} parent=63 // loop_footer
            %s364 = sadd.s32 1, %s360
          $region70: #{tpu_custom_call.1} parent=63 // loop_footer_branch
            %359 = sbr.rel target = $region66
          $region71: #{tpu_custom_call.1} parent=63 // loop_exit
            _
          %v384 = vxor.u32 %v365, 2147483648
          %v385 = vxor.u32 %v366, 2147483648
          %v386 = vmul.f32 %v384, 1.442695
          %v387 = vpow.pop %v386
          %v388 = vmul.f32 %v385, 1.442695
          %v389 = vpow.pop %v388
          %v390 = vadd.f32 %v387, 1.0
          %v391 = vadd.f32 %v389, 1.0
          %v392 = vrcp.pop %v390
          %v393 = vmul.f32 %v390, %v392
          %v394 = vsub.f32 1.0, %v393
          %v395 = vmul.f32 %v392, %v394
          %v396 = vadd.f32 %v392, %v395
          %vm397 = vweird.f32 %v390
          %vm398 = vweird.f32 %v392
          %vm399 = vmor %vm397, %vm398
          %v400 = vsel %vm399, %v392, %v396
          %v401 = vand.u32 2147483647, %v390
          %vm402 = vcmp.eq.f32.partialorder %v401, 8.507059e+37
          %v403 = vand.u32 %v390, 2147483648
          %v404 = vor.u32 1.1754944e-38, %v403
          %v405 = vsel %vm402, %v404, %v400
          %v406 = vmul.f32 1.0, %v405
          %v407 = vrcp.pop %v391
          %v408 = vmul.f32 %v391, %v407
          %v409 = vsub.f32 1.0, %v408
          %v410 = vmul.f32 %v407, %v409
          %v411 = vadd.f32 %v407, %v410
          %vm412 = vweird.f32 %v391
          %vm413 = vweird.f32 %v407
          %vm414 = vmor %vm412, %vm413
          %v415 = vsel %vm414, %v407, %v411
          %v416 = vand.u32 2147483647, %v391
          %vm417 = vcmp.eq.f32.partialorder %v416, 8.507059e+37
          %v418 = vand.u32 %v391, 2147483648
          %v419 = vor.u32 1.1754944e-38, %v418
          %v420 = vsel %vm417, %v419, %v415
          %v421 = vmul.f32 1.0, %v420
          %v422 = vld [vmem:[#allocation11] sm:$0xff]
          %v423 = vld [vmem:[#allocation11 + $0x8] sm:$0xff]
          %v424 = vmul.f32 %v422, %v406
          %v425 = vmul.f32 %v423, %v421
          %426 = vst [vmem:[#allocation2] sm:$0xff] %v424
          %427 = vst [vmem:[#allocation2 + $0x8] sm:$0xff] %v425
        $region64: #{tpu_custom_call.1} parent=39 // pred_fallthru
          _
        %v428 = vld [vmem:[%s309] sm:$0xff]
        %v429 = vld [vmem:[#allocation2] sm:$0xff]
        %v430 = vld [vmem:[#allocation2 + $0x8] sm:$0xff]
        %vm431 = vcmask 130048
        %v433 = vsel %vm431, %v428, 0
        %435 = vmatpush.msra.mxu0 0.0
        %436 = vmatpush.msra.mxu0 0.0
        %437 = vmatpush.msra.mxu0 0.0
        %438 = vmatpush.msra.mxu0 0.0
        %439 = vmatpush.msra.mxu0 0.0
        %440 = vmatpush.msra.mxu0 0.0
        %441 = vmatpush.msra.mxu0 0.0
        %442 = vmatpush.msra.mxu0 0.0
        %443 = vmatpush.msra.mxu0 0.0
        %444 = vmatpush.msra.mxu0 0.0
        %445 = vmatpush.msra.mxu0 0.0
        %446 = vmatpush.msra.mxu0 0.0
        %447 = vmatpush.msra.mxu0 0.0
        %448 = vmatpush.msra.mxu0 0.0
        %449 = vmatpush.msra.mxu0 %v430
        %450 = vmatpush.msra.mxu0 %v429
        %451 = vmatmul.f32.gmra.mxu0 %v433
        %v452 = vpop.f32.mrf.mxu0
        %v453 = vadd.f32 0.0, %v452
        %454 = vdwg.mxu0
        %455 = vst [vmem:[%s352] sm:$0xff] %v453
        %s456 = sand.u32 %s183, 1
        %s457 = scalar_lea.sflag [#allocation5], %s456
        %s458 = sand.u32 %s183, 1
        %s459 = smul.addr %s458, 8
        %s460 = scalar_lea.vmem [#allocation13], %s459
        // Predicated region
        $region72: #{tpu_custom_call.1} parent=39 // pred_check
          %p461 = pneg %p193
        $region73: #{tpu_custom_call.1} parent=39 // pred_check_branch
          %463 = sbr.rel (%p461) target = $region75
        $region74: #{tpu_custom_call.1} parent=39 // pred_region
          %465 = vsyncadd %s457, 0
          %s466 = sadd.s32 %s30, %s32
          %s467 = sadd.s32 %s466, %s31
          %s468 = smul.addr %s467, 8
          %s469 = scalar_lea.hbm %s5, %s468
          %s471 = sshll.u32 %s460, 4
          %s472 = int_to_ptr.vmem [resolvable:$true] %s471
          %s473 = sshll.u32 %s469, 4
          %s474 = int_to_ptr.hbm [resolvable:$true] %s473
          %476 = dma.vmem_to_hbm [thread:$0]  %s472, 128, %s474, %s457
        $region75: #{tpu_custom_call.1} parent=39 // pred_fallthru
          _
      $region40: #{tpu_custom_call.1} parent=5 // pred_fallthru
        _
      %p477 = scmp.le.s32.totalorder 2, %s20
      // Predicated region
      $region76: #{tpu_custom_call.1} parent=5 // pred_check
        %p478 = pneg %p477
      $region77: #{tpu_custom_call.1} parent=5 // pred_check_branch
        %480 = sbr.rel (%p478) target = $region79
      $region78: #{tpu_custom_call.1} parent=5 // pred_region
        %s481 = ssub.s32 %s20, 2
        // Predicated region
        $region80: #{tpu_custom_call.1} parent=78 // pred_check
          %p482 = pneg %p199
        $region81: #{tpu_custom_call.1} parent=78 // pred_check_branch
          %484 = sbr.rel (%p482) target = $region83
        $region82: #{tpu_custom_call.1} parent=78 // pred_region
          %s485 = sand.u32 %s184, 1
          %s486 = scalar_lea.sflag [#allocation5], %s485
          %s487 = sand.u32 %s184, 1
          %s488 = smul.addr %s487, 8
          %s489 = scalar_lea.vmem [#allocation13], %s488
          %491 = dma.done %s486, 128
        $region83: #{tpu_custom_call.1} parent=78 // pred_fallthru
          _
      $region79: #{tpu_custom_call.1} parent=5 // pred_fallthru
        _
    $region6: #{tpu_custom_call.1} parent=1 // loop_footer
      %s24 = sadd.s32 1, %s20
    $region7: #{tpu_custom_call.1} parent=1 // loop_footer_branch
      %19 = sbr.rel target = $region3
    $region8: #{tpu_custom_call.1} parent=1 // loop_exit
      _
    %492 = vsyncpa [#allocation4], 1
    %s493 = scalar_lea.sflag [#allocation4], 1
    %494 = vsyncpa %s493, 1
    %495 = vsyncpa [#allocation9], 1
    %496 = vsyncpa [#allocation12], 1
    %497 = vsyncpa [#allocation5], 1
    %s498 = scalar_lea.sflag [#allocation5], 1
    %499 = vsyncpa %s498, 1
    %500 = vsyncpa [#allocation6], 1
    %s501 = scalar_lea.sflag [#allocation6], 1
    %502 = vsyncpa %s501, 1

</llo_original>
